<compile_context>
chip_gen: v6e
topology: v6e:2x2x1
jax: 0.10.0
libtpu: 0.0.40
codegen_flags: <defaults>
</compile_context>

<pallas_src>
import jax
import jax.numpy as jnp
from jax.experimental import pallas as pl
from jax.experimental.pallas import tpu as pltpu


def _count_kernel(x_ref, w1_ref, b1_ref, w2_ref, b2_ref, o_ref):
    # x_ref block: (n_win, B_tile, TP, C) bf16; w1 (C,2C) bf16; w2 (2C,C) bf16;
    # biases f32; o_ref block: (B_tile, TP, C) f32.
    n_win, bt, tp, c = x_ref.shape
    m = bt * tp
    w1 = w1_ref[...]                                      # (C, 2C)  bf16
    b1 = b1_ref[...]                                      # (1, 2C)  f32

    acc_s = None
    acc_m = None
    # n_win = pool**2 is tiny (4): static unroll keeps scheduler visibility and
    # avoids materializing the (n_win*M, 2C) intermediate (peak-VMEM saver).
    for w in range(n_win):
        xw = x_ref[w].reshape(m, c)                       # leading-dim collapse (free)
        y = jnp.dot(xw, w1, preferred_element_type=jnp.float32)
        y = jnp.maximum(y + b1, 0.0)                      # (M, 2C) f32 elementwise
        if w == 0:
            acc_s, acc_m = y[:, :c], y[:, c:]
        else:
            acc_s = acc_s + y[:, :c]                      # avg branch (1/n_win folded in w2)
            acc_m = jnp.maximum(acc_m, y[:, c:])          # max branch

    # Single fused K=2C matmul over the [sum | max] concat, then bias + ReLU.
    acc = jnp.concatenate([acc_s, acc_m], axis=1).astype(w2_ref.dtype)
    out = jnp.dot(acc, w2_ref[...], preferred_element_type=jnp.float32) + b2_ref[...]
    o_ref[...] = jnp.maximum(out, 0.0).reshape(bt, tp, c).astype(o_ref.dtype)


def _choose_tiles(N, P, C, n_win, budget=28 << 20):
    """Pick (B_tile, TP).

    TP: largest multiple-of-8 divisor of P whose double-buffered blocks fit a
    ~28 MiB budget (safe on v5e/v6e/v7x once vmem_limit_bytes is raised to 48 MiB).
    B_tile: fold batch into the matmul M dimension when feature maps are small.
    """
    def vmem(bt, tp):
        return (2 * bt * n_win * tp * C * 2      # double-buffered bf16 input block
                + 2 * bt * tp * C * 4            # double-buffered f32 output block
                + 3 * bt * tp * 2 * C * 4        # per-window y + sum/max accumulators
                + 6 * C * C * 2 + 3 * C * 4)     # resident weights + biases

    divisors = [d for d in range(8, P + 1, 8) if P % d == 0] or [P]
    fitting = [d for d in divisors if vmem(1, d) <= budget]
    TP = max(fitting) if fitting else divisors[0]

    BT = 1
    for d in range(N, 0, -1):
        if N % d == 0 and d * TP <= 4096 and vmem(d, TP) <= budget:
            BT = d
            break
    return BT, TP


def count_layer_forward(x_nchw, params, pool=2):
    wa, ba, wm, bm, w2, b2 = (params[k] for k in
                              ("wa", "ba", "wm", "bm", "w2", "b2"))
    N, C, H, W = x_nchw.shape
    assert H % pool == 0 and W % pool == 0
    Ho, Wo = H // pool, W // pool
    P = Ho * Wo
    n_win = pool * pool

    # Glue: single transpose grouping the pooling window as the leading axis.
    x = x_nchw.reshape(N, C, Ho, pool, Wo, pool)
    x = jnp.transpose(x, (3, 5, 0, 2, 4, 1))              # (pool, pool, N, Ho, Wo, C)
    x = x.reshape(n_win, N, P, C).astype(jnp.bfloat16)

    # Weight prep. torch Conv2d weight is (C_out, C_in, 1, 1); matmul uses W^T.
    wa_t = wa.reshape(C, C).T
    wm_t = wm.reshape(C, C).T
    w1 = jnp.concatenate([wa_t, wm_t], axis=1).astype(jnp.bfloat16)          # (C, 2C)
    b1 = jnp.concatenate([ba, bm]).reshape(1, 2 * C).astype(jnp.float32)
    w2_2d = w2.reshape(C, 2 * C)                                             # (C_out, 2C_in)
    w2_t = jnp.concatenate([w2_2d[:, :C].T * (1.0 / n_win),                  # avg rows, scale folded
                            w2_2d[:, C:].T], axis=0).astype(jnp.bfloat16)    # (2C, C)
    b22 = b2.reshape(1, C).astype(jnp.float32)

    BT, TP = _choose_tiles(N, P, C, n_win)
    grid = (N // BT, pl.cdiv(P, TP))
    full = lambda b, p: (0, 0)

    flops = 2 * N * P * C * C * (2 * n_win + 2)
    bytes_accessed = (N * n_win * P * C * 2 + N * P * C * 4
                      + 6 * C * C * 2 + 3 * C * 4)

    out = pl.pallas_call(
        _count_kernel,
        out_shape=jax.ShapeDtypeStruct((N, P, C), jnp.float32),
        grid_spec=pltpu.PrefetchScalarGridSpec(
            num_scalar_prefetch=0,
            grid=grid,
            in_specs=[
                pl.BlockSpec((n_win, BT, TP, C), lambda b, p: (0, b, p, 0)),
                pl.BlockSpec((C, 2 * C), full),
                pl.BlockSpec((1, 2 * C), full),
                pl.BlockSpec((2 * C, C), full),
                pl.BlockSpec((1, C), full),
            ],
            out_specs=pl.BlockSpec((BT, TP, C), lambda b, p: (b, p, 0)),
        ),
        compiler_params=pltpu.CompilerParams(
            dimension_semantics=("parallel", "parallel"),
            vmem_limit_bytes=48 * 1024 * 1024),
        cost_estimate=pl.CostEstimate(
            flops=flops, transcendentals=0, bytes_accessed=bytes_accessed),
    )(x, w1, b1, w2_t, b22)

    # (N, Ho*Wo, C) -> NCHW to match the PyTorch module.
    return jnp.transpose(out.reshape(N, Ho, Wo, C), (0, 3, 1, 2))


def count_layer_reference(x_nchw, params, pool=2):
    """Pure-JAX f32 reference mirroring the PyTorch forward exactly (NCHW)."""
    wa, ba, wm, bm, w2, b2 = (params[k] for k in
                              ("wa", "ba", "wm", "bm", "w2", "b2"))
    N, C, H, W = x_nchw.shape

    def conv1x1(x, w, b):
        w2d = w.reshape(w.shape[0], w.shape[1])
        y = jnp.einsum("nchw,oc->nohw", x, w2d)
        return y + b.reshape(1, -1, 1, 1)

    ya = jax.nn.relu(conv1x1(x_nchw, wa, ba))
    ym = jax.nn.relu(conv1x1(x_nchw, wm, bm))
    Ho, Wo = H // pool, W // pool
    ya = ya.reshape(N, C, Ho, pool, Wo, pool).mean(axis=(3, 5))
    ym = ym.reshape(N, C, Ho, pool, Wo, pool).max(axis=(3, 5))
    z = jnp.concatenate([ya, ym], axis=1)
    return jax.nn.relu(conv1x1(z, w2, b2))


def init_params(key, inplanes):
    ks = jax.random.split(key, 6)
    s = 0.05
    return {
        "wa": s * jax.random.normal(ks[0], (inplanes, inplanes, 1, 1), jnp.float32),
        "ba": s * jax.random.normal(ks[1], (inplanes,), jnp.float32),
        "wm": s * jax.random.normal(ks[2], (inplanes, inplanes, 1, 1), jnp.float32),
        "bm": s * jax.random.normal(ks[3], (inplanes,), jnp.float32),
        "w2": s * jax.random.normal(ks[4], (inplanes, 2 * inplanes, 1, 1), jnp.float32),
        "b2": s * jax.random.normal(ks[5], (inplanes,), jnp.float32),
    }


if __name__ == "__main__":
    N, C, H, W = 2, 128, 8, 8          # small shapes; inplanes=128, pool=2
    pool = 2

    key = jax.random.PRNGKey(0)
    kx, kp = jax.random.split(key)
    x = jax.random.normal(kx, (N, C, H, W), jnp.float32)
    params = init_params(kp, C)

    out = count_layer_forward(x, params, pool=pool)
    out = jax.block_until_ready(out)

    ref = jax.block_until_ready(count_layer_reference(x, params, pool=pool))
    assert out.shape == (N, C, H // pool, W // pool), out.shape
    # bf16 matmul operands + f32 accumulation: loosened tolerance vs the f32 reference.
    assert jnp.allclose(out, ref, rtol=5e-2, atol=5e-2), \
        float(jnp.max(jnp.abs(out - ref)))

    print("KERNEL_OK")
</pallas_src>

<mosaic_0001>
module attributes {stable_mosaic.version = 11 : i64} {
  func.func @_count_kernel(%arg0: i32, %arg1: i32, %arg2: memref<4x2x16x128xbf16, #tpu.memory_space<vmem>>, %arg3: memref<128x256xbf16, #tpu.memory_space<vmem>>, %arg4: memref<1x256xf32, #tpu.memory_space<vmem>>, %arg5: memref<256x128xbf16, #tpu.memory_space<vmem>>, %arg6: memref<1x128xf32, #tpu.memory_space<vmem>>, %arg7: memref<2x16x128xf32, #tpu.memory_space<vmem>>) attributes {dimension_semantics = [#tpu.dimension_semantics<parallel>, #tpu.dimension_semantics<parallel>], iteration_bounds = array<i64: 1, 1>, scalar_prefetch = 0 : i64, scratch_operands = 0 : i64, tpu.core_type = #tpu.core_type<tc>, window_params = [{transform_indices = @transform_0, window_bounds = array<i64: 4, 2, 16, 128>}, {pipeline_mode = #tpu.pipeline_mode<synchronous>, transform_indices = @transform_1, window_bounds = array<i64: 128, 256>}, {pipeline_mode = #tpu.pipeline_mode<synchronous>, transform_indices = @transform_2, window_bounds = array<i64: 1, 256>}, {pipeline_mode = #tpu.pipeline_mode<synchronous>, transform_indices = @transform_3, window_bounds = array<i64: 256, 128>}, {pipeline_mode = #tpu.pipeline_mode<synchronous>, transform_indices = @transform_4, window_bounds = array<i64: 1, 128>}, {transform_indices = @transform_5, window_bounds = array<i64: 2, 16, 128>}]} {
    %c0 = arith.constant 0 : index
    %c0_0 = arith.constant 0 : index
    %0 = vector.load %arg3[%c0, %c0_0] : memref<128x256xbf16, #tpu.memory_space<vmem>>, vector<128x256xbf16>
    %c0_1 = arith.constant 0 : index
    %c0_2 = arith.constant 0 : index
    %1 = vector.load %arg4[%c0_1, %c0_2] : memref<1x256xf32, #tpu.memory_space<vmem>>, vector<1x256xf32>
    %c0_3 = arith.constant 0 : index
    %c0_4 = arith.constant 0 : index
    %c0_5 = arith.constant 0 : index
    %c0_6 = arith.constant 0 : index
    %2 = vector.load %arg2[%c0_3, %c0_4, %c0_5, %c0_6] : memref<4x2x16x128xbf16, #tpu.memory_space<vmem>>, vector<1x2x16x128xbf16>
    %3 = vector.shape_cast %2 : vector<1x2x16x128xbf16> to vector<2x16x128xbf16>
    %4 = vector.shape_cast %3 : vector<2x16x128xbf16> to vector<32x128xbf16>
    %cst = arith.constant dense<0.000000e+00> : vector<32x256xf32>
    %5 = tpu.matmul %4, %0, %cst {dimension_numbers = #tpu.dot_dimension_numbers<[1], [0], [0], [1], [0, 0, 1, 1], [], []>} : vector<32x128xbf16>, vector<128x256xbf16>, vector<32x256xf32> -> vector<32x256xf32>
    %6 = vector.broadcast %1 : vector<1x256xf32> to vector<32x256xf32>
    %7 = arith.addf %5, %6 : vector<32x256xf32>
    %cst_7 = arith.constant 0.000000e+00 : f32
    %8 = vector.broadcast %cst_7 : f32 to vector<32x256xf32>
    %9 = arith.maximumf %7, %8 : vector<32x256xf32>
    %10 = vector.extract_strided_slice %9 {offsets = [0, 0], sizes = [32, 128], strides = [1, 1]} : vector<32x256xf32> to vector<32x128xf32>
    %11 = vector.extract_strided_slice %9 {offsets = [0, 128], sizes = [32, 128], strides = [1, 1]} : vector<32x256xf32> to vector<32x128xf32>
    %c1 = arith.constant 1 : index
    %c0_8 = arith.constant 0 : index
    %c0_9 = arith.constant 0 : index
    %c0_10 = arith.constant 0 : index
    %12 = vector.load %arg2[%c1, %c0_8, %c0_9, %c0_10] : memref<4x2x16x128xbf16, #tpu.memory_space<vmem>>, vector<1x2x16x128xbf16>
    %13 = vector.shape_cast %12 : vector<1x2x16x128xbf16> to vector<2x16x128xbf16>
    %14 = vector.shape_cast %13 : vector<2x16x128xbf16> to vector<32x128xbf16>
    %cst_11 = arith.constant dense<0.000000e+00> : vector<32x256xf32>
    %15 = tpu.matmul %14, %0, %cst_11 {dimension_numbers = #tpu.dot_dimension_numbers<[1], [0], [0], [1], [0, 0, 1, 1], [], []>} : vector<32x128xbf16>, vector<128x256xbf16>, vector<32x256xf32> -> vector<32x256xf32>
    %16 = vector.broadcast %1 : vector<1x256xf32> to vector<32x256xf32>
    %17 = arith.addf %15, %16 : vector<32x256xf32>
    %cst_12 = arith.constant 0.000000e+00 : f32
    %18 = vector.broadcast %cst_12 : f32 to vector<32x256xf32>
    %19 = arith.maximumf %17, %18 : vector<32x256xf32>
    %20 = vector.extract_strided_slice %19 {offsets = [0, 0], sizes = [32, 128], strides = [1, 1]} : vector<32x256xf32> to vector<32x128xf32>
    %21 = arith.addf %10, %20 : vector<32x128xf32>
    %22 = vector.extract_strided_slice %19 {offsets = [0, 128], sizes = [32, 128], strides = [1, 1]} : vector<32x256xf32> to vector<32x128xf32>
    %23 = arith.maximumf %11, %22 : vector<32x128xf32>
    %c2 = arith.constant 2 : index
    %c0_13 = arith.constant 0 : index
    %c0_14 = arith.constant 0 : index
    %c0_15 = arith.constant 0 : index
    %24 = vector.load %arg2[%c2, %c0_13, %c0_14, %c0_15] : memref<4x2x16x128xbf16, #tpu.memory_space<vmem>>, vector<1x2x16x128xbf16>
    %25 = vector.shape_cast %24 : vector<1x2x16x128xbf16> to vector<2x16x128xbf16>
    %26 = vector.shape_cast %25 : vector<2x16x128xbf16> to vector<32x128xbf16>
    %cst_16 = arith.constant dense<0.000000e+00> : vector<32x256xf32>
    %27 = tpu.matmul %26, %0, %cst_16 {dimension_numbers = #tpu.dot_dimension_numbers<[1], [0], [0], [1], [0, 0, 1, 1], [], []>} : vector<32x128xbf16>, vector<128x256xbf16>, vector<32x256xf32> -> vector<32x256xf32>
    %28 = vector.broadcast %1 : vector<1x256xf32> to vector<32x256xf32>
    %29 = arith.addf %27, %28 : vector<32x256xf32>
    %cst_17 = arith.constant 0.000000e+00 : f32
    %30 = vector.broadcast %cst_17 : f32 to vector<32x256xf32>
    %31 = arith.maximumf %29, %30 : vector<32x256xf32>
    %32 = vector.extract_strided_slice %31 {offsets = [0, 0], sizes = [32, 128], strides = [1, 1]} : vector<32x256xf32> to vector<32x128xf32>
    %33 = arith.addf %21, %32 : vector<32x128xf32>
    %34 = vector.extract_strided_slice %31 {offsets = [0, 128], sizes = [32, 128], strides = [1, 1]} : vector<32x256xf32> to vector<32x128xf32>
    %35 = arith.maximumf %23, %34 : vector<32x128xf32>
    %c3 = arith.constant 3 : index
    %c0_18 = arith.constant 0 : index
    %c0_19 = arith.constant 0 : index
    %c0_20 = arith.constant 0 : index
    %36 = vector.load %arg2[%c3, %c0_18, %c0_19, %c0_20] : memref<4x2x16x128xbf16, #tpu.memory_space<vmem>>, vector<1x2x16x128xbf16>
    %37 = vector.shape_cast %36 : vector<1x2x16x128xbf16> to vector<2x16x128xbf16>
    %38 = vector.shape_cast %37 : vector<2x16x128xbf16> to vector<32x128xbf16>
    %cst_21 = arith.constant dense<0.000000e+00> : vector<32x256xf32>
    %39 = tpu.matmul %38, %0, %cst_21 {dimension_numbers = #tpu.dot_dimension_numbers<[1], [0], [0], [1], [0, 0, 1, 1], [], []>} : vector<32x128xbf16>, vector<128x256xbf16>, vector<32x256xf32> -> vector<32x256xf32>
    %40 = vector.broadcast %1 : vector<1x256xf32> to vector<32x256xf32>
    %41 = arith.addf %39, %40 : vector<32x256xf32>
    %cst_22 = arith.constant 0.000000e+00 : f32
    %42 = vector.broadcast %cst_22 : f32 to vector<32x256xf32>
    %43 = arith.maximumf %41, %42 : vector<32x256xf32>
    %44 = vector.extract_strided_slice %43 {offsets = [0, 0], sizes = [32, 128], strides = [1, 1]} : vector<32x256xf32> to vector<32x128xf32>
    %45 = arith.addf %33, %44 : vector<32x128xf32>
    %46 = vector.extract_strided_slice %43 {offsets = [0, 128], sizes = [32, 128], strides = [1, 1]} : vector<32x256xf32> to vector<32x128xf32>
    %47 = arith.maximumf %35, %46 : vector<32x128xf32>
    %48 = tpu.concatenate %45, %47 in 1 : vector<32x128xf32>, vector<32x128xf32> -> vector<32x256xf32>
    %49 = arith.truncf %48 : vector<32x256xf32> to vector<32x256xbf16>
    %c0_23 = arith.constant 0 : index
    %c0_24 = arith.constant 0 : index
    %50 = vector.load %arg5[%c0_23, %c0_24] : memref<256x128xbf16, #tpu.memory_space<vmem>>, vector<256x128xbf16>
    %cst_25 = arith.constant dense<0.000000e+00> : vector<32x128xf32>
    %51 = tpu.matmul %49, %50, %cst_25 {dimension_numbers = #tpu.dot_dimension_numbers<[1], [0], [0], [1], [0, 0, 1, 1], [], []>} : vector<32x256xbf16>, vector<256x128xbf16>, vector<32x128xf32> -> vector<32x128xf32>
    %c0_26 = arith.constant 0 : index
    %c0_27 = arith.constant 0 : index
    %52 = vector.load %arg6[%c0_26, %c0_27] : memref<1x128xf32, #tpu.memory_space<vmem>>, vector<1x128xf32>
    %53 = vector.broadcast %52 : vector<1x128xf32> to vector<32x128xf32>
    %54 = arith.addf %51, %53 : vector<32x128xf32>
    %cst_28 = arith.constant 0.000000e+00 : f32
    %55 = vector.broadcast %cst_28 : f32 to vector<32x128xf32>
    %56 = arith.maximumf %54, %55 : vector<32x128xf32>
    %57 = vector.shape_cast %56 : vector<32x128xf32> to vector<2x16x128xf32>
    %c0_29 = arith.constant 0 : index
    %c0_30 = arith.constant 0 : index
    %c0_31 = arith.constant 0 : index
    %58 = vector.load %arg7[%c0_29, %c0_30, %c0_31] : memref<2x16x128xf32, #tpu.memory_space<vmem>>, vector<2x16x128xf32>
    tpu.vector_store %arg7[%c0_29, %c0_30, %c0_31], %57 {strides = array<i32>} : memref<2x16x128xf32, #tpu.memory_space<vmem>>, vector<2x16x128xf32>,
    return
  }
  func.func @transform_0(%arg0: i32, %arg1: i32) -> (i32, i32, i32, i32) {
    %c0_i32 = arith.constant 0 : i32
    %c0_i32_0 = arith.constant 0 : i32
    %c0_i32_1 = arith.constant 0 : i32
    return %c0_i32, %arg0, %arg1, %c0_i32_0 : i32, i32, i32, i32
  }
  func.func @transform_1(%arg0: i32, %arg1: i32) -> (i32, i32) {
    %c0_i32 = arith.constant 0 : i32
    %c0_i32_0 = arith.constant 0 : i32
    %c0_i32_1 = arith.constant 0 : i32
    return %c0_i32, %c0_i32_0 : i32, i32
  }
  func.func @transform_2(%arg0: i32, %arg1: i32) -> (i32, i32) {
    %c0_i32 = arith.constant 0 : i32
    %c0_i32_0 = arith.constant 0 : i32
    %c0_i32_1 = arith.constant 0 : i32
    return %c0_i32, %c0_i32_0 : i32, i32
  }
  func.func @transform_3(%arg0: i32, %arg1: i32) -> (i32, i32) {
    %c0_i32 = arith.constant 0 : i32
    %c0_i32_0 = arith.constant 0 : i32
    %c0_i32_1 = arith.constant 0 : i32
    return %c0_i32, %c0_i32_0 : i32, i32
  }
  func.func @transform_4(%arg0: i32, %arg1: i32) -> (i32, i32) {
    %c0_i32 = arith.constant 0 : i32
    %c0_i32_0 = arith.constant 0 : i32
    %c0_i32_1 = arith.constant 0 : i32
    return %c0_i32, %c0_i32_0 : i32, i32
  }
  func.func @transform_5(%arg0: i32, %arg1: i32) -> (i32, i32, i32) {
    %c0_i32 = arith.constant 0 : i32
    %c0_i32_0 = arith.constant 0 : i32
    return %arg0, %arg1, %c0_i32 : i32, i32, i32
  }
}

</mosaic_0001>

<llo_original>
// kernel: tpu_custom_call.1
$region0: #{tpu_custom_call.1}
  #allocation0 [shape = 'u32[]', space=smem, size = 0x4, offset = 0x4, fixed_abs, tag = 'smem constant byte address 0x4 - core index']
  #allocation1 [shape = 'u32[144,128]{1,0:T(1,128)}', space=vmem, size = 0x12000, scoped, tag = 'internal scratch']
  %s0 = inlined_call_operand.hbm [shape: bf16[4,2,16,128], index: 0, kind: input, shape index: {}]
  %s1 = inlined_call_operand.hbm [shape: bf16[128,256], index: 1, kind: input, shape index: {}]
  %s2 = inlined_call_operand.vmem [shape: f32[1,256], index: 2, kind: input, shape index: {}]
  %s3 = inlined_call_operand.hbm [shape: bf16[256,128], index: 3, kind: input, shape index: {}]
  %s4 = inlined_call_operand.vmem [shape: f32[1,128], index: 4, kind: input, shape index: {}]
  %s5 = inlined_call_operand.hbm [shape: f32[2,16,128], index: 5, kind: output, shape index: {}]
  %s6 = sld [smem:[#allocation0]]
  $region42: #{tpu_custom_call.1} parent=0
    _
  %s8 = ssub.s32 1, %s6
  %s9 = scalar_select 0, %s8, %s6
  $region1: #{tpu_custom_call.1} parent=0
    #allocation2 [shape = 'u8[32768]{0}', space=vmem, size = 0x8000, scoped, tag = 'input window, operand 0, single buffered']
    #allocation3 [shape = 's32[1]{0}', space=sflag, size = 0x4, scoped, tag = 'scoped memory for tpu_custom_call.1']
    #allocation4 [shape = 's32[1]{0}', space=sflag, size = 0x4, scoped, tag = 'scoped memory for tpu_custom_call.1']
    #allocation5 [shape = 'u8[65536]{0}', space=vmem, size = 0x10000, scoped, tag = 'input window, operand 1, single buffered']
    #allocation6 [shape = 's32[1]{0}', space=sflag, size = 0x4, scoped, tag = 'scoped memory for tpu_custom_call.1']
    #allocation7 [shape = 'u8[65536]{0}', space=vmem, size = 0x10000, scoped, tag = 'input window, operand 3, single buffered']
    #allocation8 [shape = 'u8[16384]{0}', space=vmem, size = 0x4000, scoped, tag = 'output window, operand 0, single buffered']
    %10 = vsyncpa [#allocation3], 0
    %11 = vsyncpa [#allocation6], 0
    %12 = vsyncpa [#allocation4], 0
    // Predicated region
    $region2: #{tpu_custom_call.1} parent=1 // pred_check
      _
    $region3: #{tpu_custom_call.1} parent=1 // pred_check_branch
      %14 = sbr.rel (0) target = $region5
    $region4: #{tpu_custom_call.1} parent=1 // pred_region
      %s16 = ssub.s32 1024, 1024
      %17 = vsyncadd [#allocation3], %s16
      %s18 = sshll.u32 [#allocation2], 4
      %s19 = int_to_ptr.vmem [resolvable:$true] %s18
      %24 = dma.hbm_to_vmem [thread:$0]  %s0, 1024, %s19, [#allocation3], 64, 64, 4
    $region5: #{tpu_custom_call.1} parent=1 // pred_fallthru
      _
    // Predicated region
    $region6: #{tpu_custom_call.1} parent=1 // pred_check
      _
    $region7: #{tpu_custom_call.1} parent=1 // pred_check_branch
      %26 = sbr.rel (0) target = $region9
    $region8: #{tpu_custom_call.1} parent=1 // pred_region
      %s28 = ssub.s32 2048, 2048
      %29 = vsyncadd [#allocation6], %s28
      %s30 = sshll.u32 [#allocation5], 4
      %s31 = int_to_ptr.vmem [resolvable:$true] %s30
      %36 = dma.hbm_to_vmem [thread:$0]  %s1, 2048, %s31, [#allocation6], 128, 128, 8
    $region9: #{tpu_custom_call.1} parent=1 // pred_fallthru
      _
    // Predicated region
    $region10: #{tpu_custom_call.1} parent=1 // pred_check
      _
    $region11: #{tpu_custom_call.1} parent=1 // pred_check_branch
      %38 = sbr.rel (0) target = $region13
    $region12: #{tpu_custom_call.1} parent=1 // pred_region
      _
    $region13: #{tpu_custom_call.1} parent=1 // pred_fallthru
      _
    // Predicated region
    $region14: #{tpu_custom_call.1} parent=1 // pred_check
      _
    $region15: #{tpu_custom_call.1} parent=1 // pred_check_branch
      %40 = sbr.rel (0) target = $region17
    $region16: #{tpu_custom_call.1} parent=1 // pred_region
      %s42 = ssub.s32 2048, 2048
      %43 = vsyncadd [#allocation6], %s42
      %s44 = sshll.u32 [#allocation7], 4
      %s45 = int_to_ptr.vmem [resolvable:$true] %s44
      %50 = dma.hbm_to_vmem [thread:$0]  %s3, 2048, %s45, [#allocation6], 64, 64, 4
    $region17: #{tpu_custom_call.1} parent=1 // pred_fallthru
      _
    // Predicated region
    $region18: #{tpu_custom_call.1} parent=1 // pred_check
      _
    $region19: #{tpu_custom_call.1} parent=1 // pred_check_branch
      %52 = sbr.rel (0) target = $region21
    $region20: #{tpu_custom_call.1} parent=1 // pred_region
      _
    $region21: #{tpu_custom_call.1} parent=1 // pred_fallthru
      _
    // Predicated region
    $region22: #{tpu_custom_call.1} parent=1 // pred_check
      _
    $region23: #{tpu_custom_call.1} parent=1 // pred_check_branch
      %54 = sbr.rel (0) target = $region25
    $region24: #{tpu_custom_call.1} parent=1 // pred_region
      %55 = dma.done [#allocation3], 1024
    $region25: #{tpu_custom_call.1} parent=1 // pred_fallthru
      _
    // Predicated region
    $region26: #{tpu_custom_call.1} parent=1 // pred_check
      _
    $region27: #{tpu_custom_call.1} parent=1 // pred_check_branch
      %57 = sbr.rel (0) target = $region29
    $region28: #{tpu_custom_call.1} parent=1 // pred_region
      %58 = dma.done [#allocation6], 2048
    $region29: #{tpu_custom_call.1} parent=1 // pred_fallthru
      _
    // Predicated region
    $region30: #{tpu_custom_call.1} parent=1 // pred_check
      _
    $region31: #{tpu_custom_call.1} parent=1 // pred_check_branch
      %60 = sbr.rel (0) target = $region33
    $region32: #{tpu_custom_call.1} parent=1 // pred_region
      %61 = dma.done [#allocation6], 2048
    $region33: #{tpu_custom_call.1} parent=1 // pred_fallthru
      _
    %v63 = vld [vmem:[#allocation5] sm:$0xff]
    %v64 = vld [vmem:[#allocation5 + $0x8] sm:$0xff]
    %v65 = vld [vmem:[#allocation5 + $0x10] sm:$0xff]
    %v66 = vld [vmem:[#allocation5 + $0x18] sm:$0xff]
    %v67 = vld [vmem:[#allocation5 + $0x20] sm:$0xff]
    %v68 = vld [vmem:[#allocation5 + $0x28] sm:$0xff]
    %v69 = vld [vmem:[#allocation5 + $0x30] sm:$0xff]
    %v70 = vld [vmem:[#allocation5 + $0x38] sm:$0xff]
    %v71 = vld [vmem:[#allocation5 + $0x40] sm:$0xff]
    %v72 = vld [vmem:[#allocation5 + $0x48] sm:$0xff]
    %v73 = vld [vmem:[#allocation5 + $0x50] sm:$0xff]
    %v74 = vld [vmem:[#allocation5 + $0x58] sm:$0xff]
    %v75 = vld [vmem:[#allocation5 + $0x60] sm:$0xff]
    %v76 = vld [vmem:[#allocation5 + $0x68] sm:$0xff]
    %v77 = vld [vmem:[#allocation5 + $0x70] sm:$0xff]
    %v78 = vld [vmem:[#allocation5 + $0x78] sm:$0xff]
    %v79 = vld [vmem:[%s2] sm:$0x3]
    %v80 = vld [vmem:[#allocation2] sm:$0xf]
    %v81 = vld [vmem:[#allocation2 + $0x4] sm:$0xf]
    %v82 = vld [vmem:[#allocation2 + $0x8] sm:$0xf]
    %v83 = vld [vmem:[#allocation2 + $0xc] sm:$0xf]
    %v85 = vlaneseq
    %v86 = vshrl.u32 %v85, 7
    %v87 = vsub.s32 0, %v86
    %v88 = vrot.slane %v79, %v87
    %v89 = vlaneseq
    %v90 = vshrl.u32 %v89, 7
    %v91 = vsub.s32 1, %v90
    %v92 = vrot.slane %v79, %v91
    %v99 = vunpack.c.l.b16 %v80
    %v100 = vunpack.c.l.b16 %v81
    %v101 = vunpack.c.l.b16 %v82
    %v102 = vunpack.c.l.b16 %v83
    %v103 = vpack.c.b16 %v100, %v99
    %v104 = vpack.c.b16 %v102, %v101
    %v123 = vunpack.c.l.b16 %v63
    %v124 = vunpack.c.h.b16 %v63
    %v125 = vunpack.c.l.b16 %v64
    %v126 = vunpack.c.h.b16 %v64
    %v127 = vunpack.c.l.b16 %v65
    %v128 = vunpack.c.h.b16 %v65
    %v129 = vunpack.c.l.b16 %v66
    %v130 = vunpack.c.h.b16 %v66
    %v131 = vunpack.c.l.b16 %v67
    %v132 = vunpack.c.h.b16 %v67
    %v133 = vunpack.c.l.b16 %v68
    %v134 = vunpack.c.h.b16 %v68
    %v135 = vunpack.c.l.b16 %v69
    %v136 = vunpack.c.h.b16 %v69
    %v137 = vunpack.c.l.b16 %v70
    %v138 = vunpack.c.h.b16 %v70
    %v139 = vunpack.c.l.b16 %v71
    %v140 = vunpack.c.h.b16 %v71
    %v141 = vunpack.c.l.b16 %v72
    %v142 = vunpack.c.h.b16 %v72
    %v143 = vunpack.c.l.b16 %v73
    %v144 = vunpack.c.h.b16 %v73
    %v145 = vunpack.c.l.b16 %v74
    %v146 = vunpack.c.h.b16 %v74
    %v147 = vunpack.c.l.b16 %v75
    %v148 = vunpack.c.h.b16 %v75
    %v149 = vunpack.c.l.b16 %v76
    %v150 = vunpack.c.h.b16 %v76
    %v151 = vunpack.c.l.b16 %v77
    %v152 = vunpack.c.h.b16 %v77
    %v153 = vunpack.c.l.b16 %v78
    %v154 = vunpack.c.h.b16 %v78
    %v155 = vpack.c.b16 %v125, %v123
    %v156 = vpack.c.b16 %v126, %v124
    %v157 = vpack.c.b16 %v129, %v127
    %v158 = vpack.c.b16 %v130, %v128
    %v159 = vpack.c.b16 %v133, %v131
    %v160 = vpack.c.b16 %v134, %v132
    %v161 = vpack.c.b16 %v137, %v135
    %v162 = vpack.c.b16 %v138, %v136
    %v163 = vpack.c.b16 %v141, %v139
    %v164 = vpack.c.b16 %v142, %v140
    %v165 = vpack.c.b16 %v145, %v143
    %v166 = vpack.c.b16 %v146, %v144
    %v167 = vpack.c.b16 %v149, %v147
    %v168 = vpack.c.b16 %v150, %v148
    %v169 = vpack.c.b16 %v153, %v151
    %v170 = vpack.c.b16 %v154, %v152
    %187 = vmatprep.subr.bf16.mxu0 %v170
    %188 = vmatpush1.bf16.msra.mxu0 %v169
    %189 = vmatprep.subr.bf16.mxu0 %v168
    %190 = vmatpush1.bf16.msra.mxu0 %v167
    %191 = vmatprep.subr.bf16.mxu0 %v166
    %192 = vmatpush1.bf16.msra.mxu0 %v165
    %193 = vmatprep.subr.bf16.mxu0 %v164
    %194 = vmatpush1.bf16.msra.mxu0 %v163
    %195 = vmatprep.subr.bf16.mxu0 %v162
    %196 = vmatpush1.bf16.msra.mxu0 %v161
    %197 = vmatprep.subr.bf16.mxu0 %v160
    %198 = vmatpush1.bf16.msra.mxu0 %v159
    %199 = vmatprep.subr.bf16.mxu0 %v158
    %200 = vmatpush1.bf16.msra.mxu0 %v157
    %201 = vmatprep.subr.bf16.mxu0 %v156
    %202 = vmatpush1.bf16.msra.mxu0 %v155
    %203 = vmatprep.subr.bf16.mxu0 0
    %204 = vmatpush2.bf16.msra.mxu0 0
    %205 = vmatprep.subr.bf16.mxu0 0
    %206 = vmatpush2.bf16.msra.mxu0 0
    %207 = vmatprep.subr.bf16.mxu0 0
    %208 = vmatpush2.bf16.msra.mxu0 0
    %209 = vmatprep.subr.bf16.mxu0 0
    %210 = vmatpush2.bf16.msra.mxu0 0
    %211 = vmatprep.subr.bf16.mxu0 0
    %212 = vmatpush2.bf16.msra.mxu0 0
    %213 = vmatprep.subr.bf16.mxu0 0
    %214 = vmatpush2.bf16.msra.mxu0 0
    %215 = vmatprep.subr.bf16.mxu0 0
    %216 = vmatpush2.bf16.msra.mxu0 0
    %217 = vmatprep.subr.bf16.mxu0 0
    %218 = vmatpush2.bf16.msra.mxu0 0
    %219 = vmatprep.mubr.bf16.mxu0 0
    %220 = vmatmul.mubr.bf16.gmra.mxu0 %v103
    %v221 = vpop.f32.mrf.mxu0
    %v222 = vadd.f32 %v88, %v221
    %v223 = vpop.f32.mrf.mxu0
    %v224 = vadd.f32 %v92, %v223
    %v225 = vpop.f32.mrf.mxu0
    %v226 = vadd.f32 %v88, %v225
    %v227 = vpop.f32.mrf.mxu0
    %v228 = vadd.f32 %v92, %v227
    %229 = vmatprep.mubr.bf16.mxu0 0
    %230 = vmatmul.mubr.bf16.gmra.mxu0 %v104
    %v231 = vpop.f32.mrf.mxu0
    %v232 = vadd.f32 %v88, %v231
    %v233 = vpop.f32.mrf.mxu0
    %v234 = vadd.f32 %v92, %v233
    %v235 = vpop.f32.mrf.mxu0
    %v236 = vadd.f32 %v88, %v235
    %v237 = vpop.f32.mrf.mxu0
    %v238 = vadd.f32 %v92, %v237
    %239 = vdwg.mxu0
    %v240 = vmax.f32 %v222, 0.0
    %v241 = vmax.f32 %v224, 0.0
    %v242 = vmax.f32 %v226, 0.0
    %v243 = vmax.f32 %v228, 0.0
    %v244 = vmax.f32 %v232, 0.0
    %v245 = vmax.f32 %v234, 0.0
    %v246 = vmax.f32 %v236, 0.0
    %v247 = vmax.f32 %v238, 0.0
    %s248 = scalar_lea.vmem [#allocation2], 16
    %v249 = vld [vmem:[%s248] sm:$0xf]
    %v250 = vld [vmem:[%s248 + $0x4] sm:$0xf]
    %v251 = vld [vmem:[%s248 + $0x8] sm:$0xf]
    %v252 = vld [vmem:[%s248 + $0xc] sm:$0xf]
    %v257 = vunpack.c.l.b16 %v249
    %v258 = vunpack.c.l.b16 %v250
    %v259 = vunpack.c.l.b16 %v251
    %v260 = vunpack.c.l.b16 %v252
    %v261 = vpack.c.b16 %v258, %v257
    %v262 = vpack.c.b16 %v260, %v259
    %265 = vmatprep.subr.bf16.mxu0 %v170
    %266 = vmatpush1.bf16.msra.mxu0 %v169
    %267 = vmatprep.subr.bf16.mxu0 %v168
    %268 = vmatpush1.bf16.msra.mxu0 %v167
    %269 = vmatprep.subr.bf16.mxu0 %v166
    %270 = vmatpush1.bf16.msra.mxu0 %v165
    %271 = vmatprep.subr.bf16.mxu0 %v164
    %272 = vmatpush1.bf16.msra.mxu0 %v163
    %273 = vmatprep.subr.bf16.mxu0 %v162
    %274 = vmatpush1.bf16.msra.mxu0 %v161
    %275 = vmatprep.subr.bf16.mxu0 %v160
    %276 = vmatpush1.bf16.msra.mxu0 %v159
    %277 = vmatprep.subr.bf16.mxu0 %v158
    %278 = vmatpush1.bf16.msra.mxu0 %v157
    %279 = vmatprep.subr.bf16.mxu0 %v156
    %280 = vmatpush1.bf16.msra.mxu0 %v155
    %281 = vmatprep.subr.bf16.mxu0 0
    %282 = vmatpush2.bf16.msra.mxu0 0
    %283 = vmatprep.subr.bf16.mxu0 0
    %284 = vmatpush2.bf16.msra.mxu0 0
    %285 = vmatprep.subr.bf16.mxu0 0
    %286 = vmatpush2.bf16.msra.mxu0 0
    %287 = vmatprep.subr.bf16.mxu0 0
    %288 = vmatpush2.bf16.msra.mxu0 0
    %289 = vmatprep.subr.bf16.mxu0 0
    %290 = vmatpush2.bf16.msra.mxu0 0
    %291 = vmatprep.subr.bf16.mxu0 0
    %292 = vmatpush2.bf16.msra.mxu0 0
    %293 = vmatprep.subr.bf16.mxu0 0
    %294 = vmatpush2.bf16.msra.mxu0 0
    %295 = vmatprep.subr.bf16.mxu0 0
    %296 = vmatpush2.bf16.msra.mxu0 0
    %297 = vmatprep.mubr.bf16.mxu0 0
    %298 = vmatmul.mubr.bf16.gmra.mxu0 %v261
    %v299 = vpop.f32.mrf.mxu0
    %v300 = vadd.f32 %v88, %v299
    %v301 = vpop.f32.mrf.mxu0
    %v302 = vadd.f32 %v92, %v301
    %v303 = vpop.f32.mrf.mxu0
    %v304 = vadd.f32 %v88, %v303
    %v305 = vpop.f32.mrf.mxu0
    %v306 = vadd.f32 %v92, %v305
    %307 = vmatprep.mubr.bf16.mxu0 0
    %308 = vmatmul.mubr.bf16.gmra.mxu0 %v262
    %v309 = vpop.f32.mrf.mxu0
    %v310 = vadd.f32 %v88, %v309
    %v311 = vpop.f32.mrf.mxu0
    %v312 = vadd.f32 %v92, %v311
    %v313 = vpop.f32.mrf.mxu0
    %v314 = vadd.f32 %v88, %v313
    %v315 = vpop.f32.mrf.mxu0
    %v316 = vadd.f32 %v92, %v315
    %317 = vdwg.mxu0
    %v318 = vmax.f32 %v300, 0.0
    %v319 = vmax.f32 %v302, 0.0
    %v320 = vmax.f32 %v304, 0.0
    %v321 = vmax.f32 %v306, 0.0
    %v322 = vmax.f32 %v310, 0.0
    %v323 = vmax.f32 %v312, 0.0
    %v324 = vmax.f32 %v314, 0.0
    %v325 = vmax.f32 %v316, 0.0
    %v326 = vadd.f32 %v240, %v318
    %v327 = vadd.f32 %v242, %v320
    %v328 = vadd.f32 %v244, %v322
    %v329 = vadd.f32 %v246, %v324
    %v330 = vmax.f32 %v241, %v319
    %v331 = vmax.f32 %v243, %v321
    %v332 = vmax.f32 %v245, %v323
    %v333 = vmax.f32 %v247, %v325
    %s334 = scalar_lea.vmem [#allocation2], 32
    %v335 = vld [vmem:[%s334] sm:$0xf]
    %v336 = vld [vmem:[%s334 + $0x4] sm:$0xf]
    %v337 = vld [vmem:[%s334 + $0x8] sm:$0xf]
    %v338 = vld [vmem:[%s334 + $0xc] sm:$0xf]
    %v343 = vunpack.c.l.b16 %v335
    %v344 = vunpack.c.l.b16 %v336
    %v345 = vunpack.c.l.b16 %v337
    %v346 = vunpack.c.l.b16 %v338
    %v347 = vpack.c.b16 %v344, %v343
    %v348 = vpack.c.b16 %v346, %v345
    %351 = vmatprep.subr.bf16.mxu0 %v170
    %352 = vmatpush1.bf16.msra.mxu0 %v169
    %353 = vmatprep.subr.bf16.mxu0 %v168
    %354 = vmatpush1.bf16.msra.mxu0 %v167
    %355 = vmatprep.subr.bf16.mxu0 %v166
    %356 = vmatpush1.bf16.msra.mxu0 %v165
    %357 = vmatprep.subr.bf16.mxu0 %v164
    %358 = vmatpush1.bf16.msra.mxu0 %v163
    %359 = vmatprep.subr.bf16.mxu0 %v162
    %360 = vmatpush1.bf16.msra.mxu0 %v161
    %361 = vmatprep.subr.bf16.mxu0 %v160
    %362 = vmatpush1.bf16.msra.mxu0 %v159
    %363 = vmatprep.subr.bf16.mxu0 %v158
    %364 = vmatpush1.bf16.msra.mxu0 %v157
    %365 = vmatprep.subr.bf16.mxu0 %v156
    %366 = vmatpush1.bf16.msra.mxu0 %v155
    %367 = vmatprep.subr.bf16.mxu0 0
    %368 = vmatpush2.bf16.msra.mxu0 0
    %369 = vmatprep.subr.bf16.mxu0 0
    %370 = vmatpush2.bf16.msra.mxu0 0
    %371 = vmatprep.subr.bf16.mxu0 0
    %372 = vmatpush2.bf16.msra.mxu0 0
    %373 = vmatprep.subr.bf16.mxu0 0
    %374 = vmatpush2.bf16.msra.mxu0 0
    %375 = vmatprep.subr.bf16.mxu0 0
    %376 = vmatpush2.bf16.msra.mxu0 0
    %377 = vmatprep.subr.bf16.mxu0 0
    %378 = vmatpush2.bf16.msra.mxu0 0
    %379 = vmatprep.subr.bf16.mxu0 0
    %380 = vmatpush2.bf16.msra.mxu0 0
    %381 = vmatprep.subr.bf16.mxu0 0
    %382 = vmatpush2.bf16.msra.mxu0 0
    %383 = vmatprep.mubr.bf16.mxu0 0
    %384 = vmatmul.mubr.bf16.gmra.mxu0 %v347
    %v385 = vpop.f32.mrf.mxu0
    %v386 = vadd.f32 %v88, %v385
    %v387 = vpop.f32.mrf.mxu0
    %v388 = vadd.f32 %v92, %v387
    %v389 = vpop.f32.mrf.mxu0
    %v390 = vadd.f32 %v88, %v389
    %v391 = vpop.f32.mrf.mxu0
    %v392 = vadd.f32 %v92, %v391
    %393 = vmatprep.mubr.bf16.mxu0 0
    %394 = vmatmul.mubr.bf16.gmra.mxu0 %v348
    %v395 = vpop.f32.mrf.mxu0
    %v396 = vadd.f32 %v88, %v395
    %v397 = vpop.f32.mrf.mxu0
    %v398 = vadd.f32 %v92, %v397
    %v399 = vpop.f32.mrf.mxu0
    %v400 = vadd.f32 %v88, %v399
    %v401 = vpop.f32.mrf.mxu0
    %v402 = vadd.f32 %v92, %v401
    %403 = vdwg.mxu0
    %v404 = vmax.f32 %v386, 0.0
    %v405 = vmax.f32 %v388, 0.0
    %v406 = vmax.f32 %v390, 0.0
    %v407 = vmax.f32 %v392, 0.0
    %v408 = vmax.f32 %v396, 0.0
    %v409 = vmax.f32 %v398, 0.0
    %v410 = vmax.f32 %v400, 0.0
    %v411 = vmax.f32 %v402, 0.0
    %v412 = vadd.f32 %v326, %v404
    %v413 = vadd.f32 %v327, %v406
    %v414 = vadd.f32 %v328, %v408
    %v415 = vadd.f32 %v329, %v410
    %v416 = vmax.f32 %v330, %v405
    %v417 = vmax.f32 %v331, %v407
    %v418 = vmax.f32 %v332, %v409
    %v419 = vmax.f32 %v333, %v411
    %s420 = scalar_lea.vmem [#allocation2], 48
    %v421 = vld [vmem:[%s420] sm:$0xf]
    %v422 = vld [vmem:[%s420 + $0x4] sm:$0xf]
    %v423 = vld [vmem:[%s420 + $0x8] sm:$0xf]
    %v424 = vld [vmem:[%s420 + $0xc] sm:$0xf]
    %v429 = vunpack.c.l.b16 %v421
    %v430 = vunpack.c.l.b16 %v422
    %v431 = vunpack.c.l.b16 %v423
    %v432 = vunpack.c.l.b16 %v424
    %v433 = vpack.c.b16 %v430, %v429
    %v434 = vpack.c.b16 %v432, %v431
    %437 = vmatprep.subr.bf16.mxu0 %v170
    %438 = vmatpush1.bf16.msra.mxu0 %v169
    %439 = vmatprep.subr.bf16.mxu0 %v168
    %440 = vmatpush1.bf16.msra.mxu0 %v167
    %441 = vmatprep.subr.bf16.mxu0 %v166
    %442 = vmatpush1.bf16.msra.mxu0 %v165
    %443 = vmatprep.subr.bf16.mxu0 %v164
    %444 = vmatpush1.bf16.msra.mxu0 %v163
    %445 = vmatprep.subr.bf16.mxu0 %v162
    %446 = vmatpush1.bf16.msra.mxu0 %v161
    %447 = vmatprep.subr.bf16.mxu0 %v160
    %448 = vmatpush1.bf16.msra.mxu0 %v159
    %449 = vmatprep.subr.bf16.mxu0 %v158
    %450 = vmatpush1.bf16.msra.mxu0 %v157
    %451 = vmatprep.subr.bf16.mxu0 %v156
    %452 = vmatpush1.bf16.msra.mxu0 %v155
    %453 = vmatprep.subr.bf16.mxu0 0
    %454 = vmatpush2.bf16.msra.mxu0 0
    %455 = vmatprep.subr.bf16.mxu0 0
    %456 = vmatpush2.bf16.msra.mxu0 0
    %457 = vmatprep.subr.bf16.mxu0 0
    %458 = vmatpush2.bf16.msra.mxu0 0
    %459 = vmatprep.subr.bf16.mxu0 0
    %460 = vmatpush2.bf16.msra.mxu0 0
    %461 = vmatprep.subr.bf16.mxu0 0
    %462 = vmatpush2.bf16.msra.mxu0 0
    %463 = vmatprep.subr.bf16.mxu0 0
    %464 = vmatpush2.bf16.msra.mxu0 0
    %465 = vmatprep.subr.bf16.mxu0 0
    %466 = vmatpush2.bf16.msra.mxu0 0
    %467 = vmatprep.subr.bf16.mxu0 0
    %468 = vmatpush2.bf16.msra.mxu0 0
    %469 = vmatprep.mubr.bf16.mxu0 0
    %470 = vmatmul.mubr.bf16.gmra.mxu0 %v433
    %v471 = vpop.f32.mrf.mxu0
    %v472 = vadd.f32 %v88, %v471
    %v473 = vpop.f32.mrf.mxu0
    %v474 = vadd.f32 %v92, %v473
    %v475 = vpop.f32.mrf.mxu0
    %v476 = vadd.f32 %v88, %v475
    %v477 = vpop.f32.mrf.mxu0
    %v478 = vadd.f32 %v92, %v477
    %479 = vmatprep.mubr.bf16.mxu0 0
    %480 = vmatmul.mubr.bf16.gmra.mxu0 %v434
    %v481 = vpop.f32.mrf.mxu0
    %v482 = vadd.f32 %v88, %v481
    %v483 = vpop.f32.mrf.mxu0
    %v484 = vadd.f32 %v92, %v483
    %v485 = vpop.f32.mrf.mxu0
    %v486 = vadd.f32 %v88, %v485
    %v487 = vpop.f32.mrf.mxu0
    %v488 = vadd.f32 %v92, %v487
    %489 = vdwg.mxu0
    %v490 = vmax.f32 %v472, 0.0
    %v491 = vmax.f32 %v474, 0.0
    %v492 = vmax.f32 %v476, 0.0
    %v493 = vmax.f32 %v478, 0.0
    %v494 = vmax.f32 %v482, 0.0
    %v495 = vmax.f32 %v484, 0.0
    %v496 = vmax.f32 %v486, 0.0
    %v497 = vmax.f32 %v488, 0.0
    %v498 = vadd.f32 %v412, %v490
    %v499 = vadd.f32 %v413, %v492
    %v500 = vadd.f32 %v414, %v494
    %v501 = vadd.f32 %v415, %v496
    %v502 = vmax.f32 %v416, %v491
    %v503 = vmax.f32 %v417, %v493
    %v504 = vmax.f32 %v418, %v495
    %v505 = vmax.f32 %v419, %v497
    %v506 = vpack.c.bf16 %v499, %v498
    %v507 = vpack.c.bf16 %v503, %v502
    %v508 = vpack.c.bf16 %v501, %v500
    %v509 = vpack.c.bf16 %v505, %v504
    %v510 = vld [vmem:[#allocation7] sm:$0xf]
    %v511 = vld [vmem:[#allocation7 + $0x4] sm:$0xf]
    %v512 = vld [vmem:[#allocation7 + $0x8] sm:$0xf]
    %v513 = vld [vmem:[#allocation7 + $0xc] sm:$0xf]
    %v514 = vld [vmem:[#allocation7 + $0x10] sm:$0xf]
    %v515 = vld [vmem:[#allocation7 + $0x14] sm:$0xf]
    %v516 = vld [vmem:[#allocation7 + $0x18] sm:$0xf]
    %v517 = vld [vmem:[#allocation7 + $0x1c] sm:$0xf]
    %v518 = vld [vmem:[#allocation7 + $0x20] sm:$0xf]
    %v519 = vld [vmem:[#allocation7 + $0x24] sm:$0xf]
    %v520 = vld [vmem:[#allocation7 + $0x28] sm:$0xf]
    %v521 = vld [vmem:[#allocation7 + $0x2c] sm:$0xf]
    %v522 = vld [vmem:[#allocation7 + $0x30] sm:$0xf]
    %v523 = vld [vmem:[#allocation7 + $0x34] sm:$0xf]
    %v524 = vld [vmem:[#allocation7 + $0x38] sm:$0xf]
    %v525 = vld [vmem:[#allocation7 + $0x3c] sm:$0xf]
    %v526 = vld [vmem:[#allocation7 + $0x40] sm:$0xf]
    %v527 = vld [vmem:[#allocation7 + $0x44] sm:$0xf]
    %v528 = vld [vmem:[#allocation7 + $0x48] sm:$0xf]
    %v529 = vld [vmem:[#allocation7 + $0x4c] sm:$0xf]
    %v530 = vld [vmem:[#allocation7 + $0x50] sm:$0xf]
    %v531 = vld [vmem:[#allocation7 + $0x54] sm:$0xf]
    %v532 = vld [vmem:[#allocation7 + $0x58] sm:$0xf]
    %v533 = vld [vmem:[#allocation7 + $0x5c] sm:$0xf]
    %v534 = vld [vmem:[#allocation7 + $0x60] sm:$0xf]
    %v535 = vld [vmem:[#allocation7 + $0x64] sm:$0xf]
    %v536 = vld [vmem:[#allocation7 + $0x68] sm:$0xf]
    %v537 = vld [vmem:[#allocation7 + $0x6c] sm:$0xf]
    %v538 = vld [vmem:[#allocation7 + $0x70] sm:$0xf]
    %v539 = vld [vmem:[#allocation7 + $0x74] sm:$0xf]
    %v540 = vld [vmem:[#allocation7 + $0x78] sm:$0xf]
    %v541 = vld [vmem:[#allocation7 + $0x7c] sm:$0xf]
    %v542 = vld [vmem:[%s4] sm:$0x1]
    %v544 = vlaneseq
    %v545 = vshrl.u32 %v544, 7
    %v546 = vsub.s32 0, %v545
    %v547 = vrot.slane %v542, %v546
    %v581 = vunpack.c.l.b16 %v510
    %v582 = vunpack.c.l.b16 %v511
    %v583 = vunpack.c.l.b16 %v512
    %v584 = vunpack.c.l.b16 %v513
    %v585 = vunpack.c.l.b16 %v514
    %v586 = vunpack.c.l.b16 %v515
    %v587 = vunpack.c.l.b16 %v516
    %v588 = vunpack.c.l.b16 %v517
    %v589 = vunpack.c.l.b16 %v518
    %v590 = vunpack.c.l.b16 %v519
    %v591 = vunpack.c.l.b16 %v520
    %v592 = vunpack.c.l.b16 %v521
    %v593 = vunpack.c.l.b16 %v522
    %v594 = vunpack.c.l.b16 %v523
    %v595 = vunpack.c.l.b16 %v524
    %v596 = vunpack.c.l.b16 %v525
    %v597 = vunpack.c.l.b16 %v526
    %v598 = vunpack.c.l.b16 %v527
    %v599 = vunpack.c.l.b16 %v528
    %v600 = vunpack.c.l.b16 %v529
    %v601 = vunpack.c.l.b16 %v530
    %v602 = vunpack.c.l.b16 %v531
    %v603 = vunpack.c.l.b16 %v532
    %v604 = vunpack.c.l.b16 %v533
    %v605 = vunpack.c.l.b16 %v534
    %v606 = vunpack.c.l.b16 %v535
    %v607 = vunpack.c.l.b16 %v536
    %v608 = vunpack.c.l.b16 %v537
    %v609 = vunpack.c.l.b16 %v538
    %v610 = vunpack.c.l.b16 %v539
    %v611 = vunpack.c.l.b16 %v540
    %v612 = vunpack.c.l.b16 %v541
    %v613 = vpack.c.b16 %v582, %v581
    %v614 = vpack.c.b16 %v584, %v583
    %v615 = vpack.c.b16 %v586, %v585
    %v616 = vpack.c.b16 %v588, %v587
    %v617 = vpack.c.b16 %v590, %v589
    %v618 = vpack.c.b16 %v592, %v591
    %v619 = vpack.c.b16 %v594, %v593
    %v620 = vpack.c.b16 %v596, %v595
    %v621 = vpack.c.b16 %v598, %v597
    %v622 = vpack.c.b16 %v600, %v599
    %v623 = vpack.c.b16 %v602, %v601
    %v624 = vpack.c.b16 %v604, %v603
    %v625 = vpack.c.b16 %v606, %v605
    %v626 = vpack.c.b16 %v608, %v607
    %v627 = vpack.c.b16 %v610, %v609
    %v628 = vpack.c.b16 %v612, %v611
    %645 = vmatprep.subr.bf16.mxu0 0
    %646 = vmatpush1.bf16.msra.mxu0 %v620
    %647 = vmatprep.subr.bf16.mxu0 0
    %648 = vmatpush1.bf16.msra.mxu0 %v619
    %649 = vmatprep.subr.bf16.mxu0 0
    %650 = vmatpush1.bf16.msra.mxu0 %v618
    %651 = vmatprep.subr.bf16.mxu0 0
    %652 = vmatpush1.bf16.msra.mxu0 %v617
    %653 = vmatprep.subr.bf16.mxu0 0
    %654 = vmatpush1.bf16.msra.mxu0 %v616
    %655 = vmatprep.subr.bf16.mxu0 0
    %656 = vmatpush1.bf16.msra.mxu0 %v615
    %657 = vmatprep.subr.bf16.mxu0 0
    %658 = vmatpush1.bf16.msra.mxu0 %v614
    %659 = vmatprep.subr.bf16.mxu0 0
    %660 = vmatpush1.bf16.msra.mxu0 %v613
    %661 = vmatprep.subr.bf16.mxu0 0
    %662 = vmatpush2.bf16.msra.mxu0 %v628
    %663 = vmatprep.subr.bf16.mxu0 0
    %664 = vmatpush2.bf16.msra.mxu0 %v627
    %665 = vmatprep.subr.bf16.mxu0 0
    %666 = vmatpush2.bf16.msra.mxu0 %v626
    %667 = vmatprep.subr.bf16.mxu0 0
    %668 = vmatpush2.bf16.msra.mxu0 %v625
    %669 = vmatprep.subr.bf16.mxu0 0
    %670 = vmatpush2.bf16.msra.mxu0 %v624
    %671 = vmatprep.subr.bf16.mxu0 0
    %672 = vmatpush2.bf16.msra.mxu0 %v623
    %673 = vmatprep.subr.bf16.mxu0 0
    %674 = vmatpush2.bf16.msra.mxu0 %v622
    %675 = vmatprep.subr.bf16.mxu0 0
    %676 = vmatpush2.bf16.msra.mxu0 %v621
    %677 = vmatprep.mubr.bf16.mxu0 %v507
    %678 = vmatmul.mubr.bf16.gmra.mxu0 %v506
    %v679 = vpop.f32.mrf.mxu0
    %v680 = vadd.f32 %v547, %v679
    %v681 = vpop.f32.mrf.mxu0
    %v682 = vpop.f32.mrf.mxu0
    %v683 = vadd.f32 %v547, %v682
    %v684 = vpop.f32.mrf.mxu0
    %685 = vmatprep.mubr.bf16.mxu0 %v509
    %686 = vmatmul.mubr.bf16.gmra.mxu0 %v508
    %v687 = vpop.f32.mrf.mxu0
    %v688 = vadd.f32 %v547, %v687
    %v689 = vpop.f32.mrf.mxu0
    %v690 = vpop.f32.mrf.mxu0
    %v691 = vadd.f32 %v547, %v690
    %v692 = vpop.f32.mrf.mxu0
    %693 = vdwg.mxu0
    %v694 = vmax.f32 %v680, 0.0
    %v695 = vmax.f32 %v683, 0.0
    %v696 = vmax.f32 %v688, 0.0
    %v697 = vmax.f32 %v691, 0.0
    %698 = vst [vmem:[#allocation8] sm:$0xff] %v694
    %699 = vst [vmem:[#allocation8 + $0x8] sm:$0xff] %v695
    %700 = vst [vmem:[#allocation8 + $0x10] sm:$0xff] %v696
    %701 = vst [vmem:[#allocation8 + $0x18] sm:$0xff] %v697
    // Predicated region
    $region34: #{tpu_custom_call.1} parent=1 // pred_check
      _
    $region35: #{tpu_custom_call.1} parent=1 // pred_check_branch
      %703 = sbr.rel (0) target = $region37
    $region36: #{tpu_custom_call.1} parent=1 // pred_region
      %s705 = ssub.s32 512, 512
      %706 = vsyncadd [#allocation4], %s705
      %s707 = sshll.u32 [#allocation8], 4
      %s708 = int_to_ptr.vmem [resolvable:$true] %s707
      %713 = dma.vmem_to_hbm [thread:$0]  %s708, 512, %s5, [#allocation4], 128, 128, 8
    $region37: #{tpu_custom_call.1} parent=1 // pred_fallthru
      _
    // Predicated region
    $region38: #{tpu_custom_call.1} parent=1 // pred_check
      _
    $region39: #{tpu_custom_call.1} parent=1 // pred_check_branch
      %715 = sbr.rel (0) target = $region41
    $region40: #{tpu_custom_call.1} parent=1 // pred_region
      %716 = dma.done [#allocation4], 512
    $region41: #{tpu_custom_call.1} parent=1 // pred_fallthru
      _
    %717 = vsyncpa [#allocation3], 1
    %718 = vsyncpa [#allocation6], 1
    %719 = vsyncpa [#allocation4], 1

</llo_original>
